<compile_context>
chip_gen: v6e
topology: v6e:2x2x1
jax: 0.10.0
libtpu: 0.0.40
codegen_flags: <defaults>
</compile_context>

<pallas_src>
import jax
import jax.numpy as jnp
from jax.experimental import pallas as pl
from jax.experimental.pallas import tpu as pltpu

MASK_NUMBER = -10000000.0
_LANE = 128


def _round_up(n, m):
    return ((n + m - 1) // m) * m


def _policy_kernel(x_ref, w1_ref, b1_ref, w2_ref, b2_ref, w3_ref, b3_ref, out_ref):
    x = x_ref[...]                                               # (TB, Dp)

    # Layer 1: Linear + ReLU (MXU matmul, f32 accumulate)
    h = jnp.dot(x, w1_ref[...], preferred_element_type=jnp.float32)
    h = jnp.maximum(h + b1_ref[...], 0.0)

    # Layer 2: Linear + ReLU
    h = jnp.dot(h, w2_ref[...], preferred_element_type=jnp.float32)
    h = jnp.maximum(h + b2_ref[...], 0.0)

    # Output layer: padded lanes of b3 are -inf -> those logits stay -inf.
    logits = jnp.dot(h, w3_ref[...], preferred_element_type=jnp.float32)
    logits = logits + b3_ref[...]                                # (TB, Dp)

    # logits[x > 0.5] = mask_number   (padded obs lanes are 0 -> untouched)
    logits = jnp.where(x > 0.5, MASK_NUMBER, logits)

    # Numerically stable softmax over the (lane-dense) last dim.
    m = jnp.max(logits, axis=-1, keepdims=True)
    e = jnp.exp(logits - m)                                      # padded lanes -> exp(-inf) = 0
    denom = jnp.sum(e, axis=-1, keepdims=True)
    inv = pl.reciprocal(denom, approx=True)                      # EUP vrcp (free slot)
    inv = inv * (2.0 - denom * inv)                              # one Newton step: <1e-6 rel err
    out_ref[...] = e * inv


def policy_net_forward(x, params, *, tile_b=512):
    """x: (B, D) float32. params: w1,b1,w2,b2,w3,b3 with weights stored (in, out),
    biases (1, out)."""
    w1, b1, w2, b2, w3, b3 = (params[k] for k in ("w1", "b1", "w2", "b2", "w3", "b3"))
    B, D = x.shape
    H1 = w1.shape[1]
    H2 = w2.shape[1]
    A = w3.shape[1]
    assert A == D, "mask assignment logits[x > 0.5] requires act_dim == obsv_dim"

    # --- lane-dense padding of the obsv/act dimension (wrapper-side layout plumbing) ---
    Dp = _round_up(max(D, _LANE), _LANE)
    xp = jnp.pad(x, ((0, 0), (0, Dp - D)))                        # padded obs bits are 0 (mask False)
    w1p = jnp.pad(w1, ((0, Dp - D), (0, 0)))                      # zero rows: h1 unchanged
    w3p = jnp.pad(w3, ((0, 0), (0, Dp - A)))                      # zero cols
    b3p = jnp.pad(b3, ((0, 0), (0, Dp - A)),
                  constant_values=-jnp.inf)                       # padded logits = -inf -> prob 0

    # --- batch tiling (parallel grid axis, double-buffered DMA pipeline) ---
    tb = min(tile_b, _round_up(B, 8))
    Bp = _round_up(B, tb)
    if Bp != B:
        xp = jnp.pad(xp, ((0, Bp - B), (0, 0)))
    grid = (Bp // tb,)

    full2d = lambda arr: pl.BlockSpec(arr.shape, lambda i: (0, 0))

    flops = 2 * Bp * (Dp * H1 + H1 * H2 + H2 * Dp) + 8 * Bp * Dp
    bytes_accessed = 4 * (xp.size + w1p.size + b1.size + w2.size + b2.size
                          + w3p.size + b3p.size + Bp * Dp)

    out = pl.pallas_call(
        _policy_kernel,
        out_shape=jax.ShapeDtypeStruct((Bp, Dp), jnp.float32),
        grid=grid,
        in_specs=[
            pl.BlockSpec((tb, Dp), lambda i: (i, 0)),             # x tile, pipelined
            full2d(w1p), full2d(b1),
            full2d(w2), full2d(b2),
            full2d(w3p), full2d(b3p),
        ],
        out_specs=pl.BlockSpec((tb, Dp), lambda i: (i, 0)),
        compiler_params=pltpu.CompilerParams(
            dimension_semantics=("parallel",)),
        cost_estimate=pl.CostEstimate(
            flops=flops, transcendentals=Bp * Dp, bytes_accessed=bytes_accessed),
    )(xp, w1p, b1, w2, b2, w3p, b3p)

    return out[:B, :A]


def init_policy_params(key, obsv_dim, act_dim, hidden_size=(256, 256), gain=1.41):
    """Deterministic init mirroring weight_init: orthogonal weights (gain=1.41), zero biases."""
    dims = (obsv_dim,) + tuple(hidden_size) + (act_dim,)
    orth = jax.nn.initializers.orthogonal(scale=gain)
    params = {}
    keys = jax.random.split(key, len(dims) - 1)
    for i, (din, dout) in enumerate(zip(dims[:-1], dims[1:]), start=1):
        # PyTorch stores (out, in); we store (in, out) so the kernel computes x @ W.
        w_pt = orth(keys[i - 1], (dout, din), jnp.float32)
        params[f"w{i}"] = jnp.transpose(w_pt)
        params[f"b{i}"] = jnp.zeros((1, dout), jnp.float32)
    return params


def _reference_forward(x, params):
    h = jax.nn.relu(x @ params["w1"] + params["b1"])
    h = jax.nn.relu(h @ params["w2"] + params["b2"])
    logits = h @ params["w3"] + params["b3"]
    logits = jnp.where(x > 0.5, MASK_NUMBER, logits)
    return jax.nn.softmax(logits, axis=-1)


if __name__ == "__main__":
    key = jax.random.PRNGKey(0)
    k_param, k_x = jax.random.split(key)

    B, D = 512, 16                   # batch, obsv_dim == act_dim (bit-select setting)
    HIDDEN = (256, 256)              # module default hidden_size

    params = init_policy_params(k_param, obsv_dim=D, act_dim=D, hidden_size=HIDDEN)
    # observation is a bit vector (0/1 floats), so the x > 0.5 mask is meaningful
    x = jax.random.bernoulli(k_x, p=0.3, shape=(B, D)).astype(jnp.float32)

    prob = jax.block_until_ready(policy_net_forward(x, params, tile_b=128))  # grid=(4,)
    ref = jax.block_until_ready(_reference_forward(x, params))

    assert prob.shape == (B, D)
    assert jnp.allclose(prob, ref, atol=1e-5, rtol=1e-5), "mismatch vs reference"
    assert jnp.allclose(jnp.sum(prob, axis=-1), 1.0, atol=1e-5)

    print("KERNEL_OK")
</pallas_src>

<mosaic_0001>
module attributes {stable_mosaic.version = 11 : i64} {
  func.func @_policy_kernel(%arg0: i32, %arg1: memref<128x128xf32, #tpu.memory_space<vmem>>, %arg2: memref<128x256xf32, #tpu.memory_space<vmem>>, %arg3: memref<1x256xf32, #tpu.memory_space<vmem>>, %arg4: memref<256x256xf32, #tpu.memory_space<vmem>>, %arg5: memref<1x256xf32, #tpu.memory_space<vmem>>, %arg6: memref<256x128xf32, #tpu.memory_space<vmem>>, %arg7: memref<1x128xf32, #tpu.memory_space<vmem>>, %arg8: memref<128x128xf32, #tpu.memory_space<vmem>>) attributes {dimension_semantics = [#tpu.dimension_semantics<parallel>], iteration_bounds = array<i64: 4>, scalar_prefetch = 0 : i64, scratch_operands = 0 : i64, tpu.core_type = #tpu.core_type<tc>, window_params = [{transform_indices = @transform_0, window_bounds = array<i64: 128, 128>}, {pipeline_mode = #tpu.pipeline_mode<synchronous>, transform_indices = @transform_1, window_bounds = array<i64: 128, 256>}, {pipeline_mode = #tpu.pipeline_mode<synchronous>, transform_indices = @transform_2, window_bounds = array<i64: 1, 256>}, {pipeline_mode = #tpu.pipeline_mode<synchronous>, transform_indices = @transform_3, window_bounds = array<i64: 256, 256>}, {pipeline_mode = #tpu.pipeline_mode<synchronous>, transform_indices = @transform_4, window_bounds = array<i64: 1, 256>}, {pipeline_mode = #tpu.pipeline_mode<synchronous>, transform_indices = @transform_5, window_bounds = array<i64: 256, 128>}, {pipeline_mode = #tpu.pipeline_mode<synchronous>, transform_indices = @transform_6, window_bounds = array<i64: 1, 128>}, {transform_indices = @transform_7, window_bounds = array<i64: 128, 128>}]} {
    %c0 = arith.constant 0 : index
    %c0_0 = arith.constant 0 : index
    %0 = vector.load %arg1[%c0, %c0_0] : memref<128x128xf32, #tpu.memory_space<vmem>>, vector<128x128xf32>
    %c0_1 = arith.constant 0 : index
    %c0_2 = arith.constant 0 : index
    %1 = vector.load %arg2[%c0_1, %c0_2] : memref<128x256xf32, #tpu.memory_space<vmem>>, vector<128x256xf32>
    %cst = arith.constant dense<0.000000e+00> : vector<128x256xf32>
    %2 = tpu.matmul %0, %1, %cst {dimension_numbers = #tpu.dot_dimension_numbers<[1], [0], [0], [1], [0, 0, 1, 1], [], []>} : vector<128x128xf32>, vector<128x256xf32>, vector<128x256xf32> -> vector<128x256xf32>
    %c0_3 = arith.constant 0 : index
    %c0_4 = arith.constant 0 : index
    %3 = vector.load %arg3[%c0_3, %c0_4] : memref<1x256xf32, #tpu.memory_space<vmem>>, vector<1x256xf32>
    %4 = vector.broadcast %3 : vector<1x256xf32> to vector<128x256xf32>
    %5 = arith.addf %2, %4 : vector<128x256xf32>
    %cst_5 = arith.constant 0.000000e+00 : f32
    %6 = vector.broadcast %cst_5 : f32 to vector<128x256xf32>
    %7 = arith.maximumf %5, %6 : vector<128x256xf32>
    %c0_6 = arith.constant 0 : index
    %c0_7 = arith.constant 0 : index
    %8 = vector.load %arg4[%c0_6, %c0_7] : memref<256x256xf32, #tpu.memory_space<vmem>>, vector<256x256xf32>
    %cst_8 = arith.constant dense<0.000000e+00> : vector<128x256xf32>
    %9 = tpu.matmul %7, %8, %cst_8 {dimension_numbers = #tpu.dot_dimension_numbers<[1], [0], [0], [1], [0, 0, 1, 1], [], []>} : vector<128x256xf32>, vector<256x256xf32>, vector<128x256xf32> -> vector<128x256xf32>
    %c0_9 = arith.constant 0 : index
    %c0_10 = arith.constant 0 : index
    %10 = vector.load %arg5[%c0_9, %c0_10] : memref<1x256xf32, #tpu.memory_space<vmem>>, vector<1x256xf32>
    %11 = vector.broadcast %10 : vector<1x256xf32> to vector<128x256xf32>
    %12 = arith.addf %9, %11 : vector<128x256xf32>
    %cst_11 = arith.constant 0.000000e+00 : f32
    %13 = vector.broadcast %cst_11 : f32 to vector<128x256xf32>
    %14 = arith.maximumf %12, %13 : vector<128x256xf32>
    %c0_12 = arith.constant 0 : index
    %c0_13 = arith.constant 0 : index
    %15 = vector.load %arg6[%c0_12, %c0_13] : memref<256x128xf32, #tpu.memory_space<vmem>>, vector<256x128xf32>
    %cst_14 = arith.constant dense<0.000000e+00> : vector<128x128xf32>
    %16 = tpu.matmul %14, %15, %cst_14 {dimension_numbers = #tpu.dot_dimension_numbers<[1], [0], [0], [1], [0, 0, 1, 1], [], []>} : vector<128x256xf32>, vector<256x128xf32>, vector<128x128xf32> -> vector<128x128xf32>
    %c0_15 = arith.constant 0 : index
    %c0_16 = arith.constant 0 : index
    %17 = vector.load %arg7[%c0_15, %c0_16] : memref<1x128xf32, #tpu.memory_space<vmem>>, vector<1x128xf32>
    %18 = vector.broadcast %17 : vector<1x128xf32> to vector<128x128xf32>
    %19 = arith.addf %16, %18 : vector<128x128xf32>
    %cst_17 = arith.constant 5.000000e-01 : f32
    %20 = vector.broadcast %cst_17 : f32 to vector<128x128xf32>
    %21 = arith.cmpf ogt, %0, %20 : vector<128x128xf32>
    %cst_18 = arith.constant -1.000000e+07 : f32
    %22 = vector.broadcast %cst_18 : f32 to vector<128x128xf32>
    %23 = arith.select %21, %22, %19 : vector<128x128xi1>, vector<128x128xf32>
    %cst_19 = arith.constant dense<0xFF800000> : vector<128xf32>
    %24 = vector.multi_reduction <maximumf>, %23, %cst_19 [1] : vector<128x128xf32> to vector<128xf32>
    %25 = vector.shape_cast %24 : vector<128xf32> to vector<128x1xf32>
    %26 = vector.broadcast %25 : vector<128x1xf32> to vector<128x128xf32>
    %27 = arith.subf %23, %26 : vector<128x128xf32>
    %28 = math.exp %27 : vector<128x128xf32>
    %cst_20 = arith.constant dense<0.000000e+00> : vector<128xf32>
    %29 = vector.multi_reduction <add>, %28, %cst_20 [1] : vector<128x128xf32> to vector<128xf32>
    %30 = vector.shape_cast %29 : vector<128xf32> to vector<128x1xf32>
    %31 = tpu.reciprocal %30 {approx = true} : vector<128x1xf32> -> vector<128x1xf32>
    %32 = arith.mulf %30, %31 : vector<128x1xf32>
    %cst_21 = arith.constant 2.000000e+00 : f32
    %33 = vector.broadcast %cst_21 : f32 to vector<128x1xf32>
    %34 = arith.subf %33, %32 : vector<128x1xf32>
    %35 = arith.mulf %31, %34 : vector<128x1xf32>
    %36 = vector.broadcast %35 : vector<128x1xf32> to vector<128x128xf32>
    %37 = arith.mulf %28, %36 : vector<128x128xf32>
    %c0_22 = arith.constant 0 : index
    %c0_23 = arith.constant 0 : index
    %38 = vector.load %arg8[%c0_22, %c0_23] : memref<128x128xf32, #tpu.memory_space<vmem>>, vector<128x128xf32>
    tpu.vector_store %arg8[%c0_22, %c0_23], %37 {strides = array<i32>} : memref<128x128xf32, #tpu.memory_space<vmem>>, vector<128x128xf32>,
    return
  }
  func.func @transform_0(%arg0: i32) -> (i32, i32) {
    %c0_i32 = arith.constant 0 : i32
    %c0_i32_0 = arith.constant 0 : i32
    return %arg0, %c0_i32 : i32, i32
  }
  func.func @transform_1(%arg0: i32) -> (i32, i32) {
    %c0_i32 = arith.constant 0 : i32
    %c0_i32_0 = arith.constant 0 : i32
    %c0_i32_1 = arith.constant 0 : i32
    return %c0_i32, %c0_i32_0 : i32, i32
  }
  func.func @transform_2(%arg0: i32) -> (i32, i32) {
    %c0_i32 = arith.constant 0 : i32
    %c0_i32_0 = arith.constant 0 : i32
    %c0_i32_1 = arith.constant 0 : i32
    return %c0_i32, %c0_i32_0 : i32, i32
  }
  func.func @transform_3(%arg0: i32) -> (i32, i32) {
    %c0_i32 = arith.constant 0 : i32
    %c0_i32_0 = arith.constant 0 : i32
    %c0_i32_1 = arith.constant 0 : i32
    return %c0_i32, %c0_i32_0 : i32, i32
  }
  func.func @transform_4(%arg0: i32) -> (i32, i32) {
    %c0_i32 = arith.constant 0 : i32
    %c0_i32_0 = arith.constant 0 : i32
    %c0_i32_1 = arith.constant 0 : i32
    return %c0_i32, %c0_i32_0 : i32, i32
  }
  func.func @transform_5(%arg0: i32) -> (i32, i32) {
    %c0_i32 = arith.constant 0 : i32
    %c0_i32_0 = arith.constant 0 : i32
    %c0_i32_1 = arith.constant 0 : i32
    return %c0_i32, %c0_i32_0 : i32, i32
  }
  func.func @transform_6(%arg0: i32) -> (i32, i32) {
    %c0_i32 = arith.constant 0 : i32
    %c0_i32_0 = arith.constant 0 : i32
    %c0_i32_1 = arith.constant 0 : i32
    return %c0_i32, %c0_i32_0 : i32, i32
  }
  func.func @transform_7(%arg0: i32) -> (i32, i32) {
    %c0_i32 = arith.constant 0 : i32
    %c0_i32_0 = arith.constant 0 : i32
    return %arg0, %c0_i32 : i32, i32
  }
}

</mosaic_0001>

<llo_original>
// kernel: tpu_custom_call.1
$region0: #{tpu_custom_call.1}
  #allocation0 [shape = 'u32[]', space=smem, size = 0x4, offset = 0x4, fixed_abs, tag = 'smem constant byte address 0x4 - core index']
  #allocation1 [shape = 'u32[144,128]{1,0:T(1,128)}', space=vmem, size = 0x12000, scoped, tag = 'internal scratch']
  %s0 = inlined_call_operand.hbm [shape: f32[512,128], index: 0, kind: input, shape index: {}]
  %s1 = inlined_call_operand.hbm [shape: f32[128,256], index: 1, kind: input, shape index: {}]
  %s2 = inlined_call_operand.vmem [shape: f32[1,256], index: 2, kind: input, shape index: {}]
  %s3 = inlined_call_operand.hbm [shape: f32[256,256], index: 3, kind: input, shape index: {}]
  %s4 = inlined_call_operand.vmem [shape: f32[1,256], index: 4, kind: input, shape index: {}]
  %s5 = inlined_call_operand.hbm [shape: f32[256,128], index: 5, kind: input, shape index: {}]
  %s6 = inlined_call_operand.vmem [shape: f32[1,128], index: 6, kind: input, shape index: {}]
  %s7 = inlined_call_operand.hbm [shape: f32[512,128], index: 7, kind: output, shape index: {}]
  %s8 = sld [smem:[#allocation0]]
  $region77: #{tpu_custom_call.1} parent=0
    _
  %s10 = ssub.s32 1, %s8
  %s11 = scalar_select 0, %s10, %s8
  $region1: #{tpu_custom_call.1} parent=0
    #allocation2 [shape = 'u8[131072]{0}', space=vmem, size = 0x20000, scoped, tag = 'input window, operand 0']
    #allocation3 [shape = 's32[2]{0}', space=sflag, size = 0x8, scoped, tag = 'scoped memory for tpu_custom_call.1']
    #allocation4 [shape = 's32[2]{0}', space=sflag, size = 0x8, scoped, tag = 'scoped memory for tpu_custom_call.1']
    #allocation5 [shape = 'u8[131072]{0}', space=vmem, size = 0x20000, scoped, tag = 'input window, operand 1, single buffered']
    #allocation6 [shape = 's32[1]{0}', space=sflag, size = 0x4, scoped, tag = 'scoped memory for tpu_custom_call.1']
    #allocation7 [shape = 'u8[262144]{0}', space=vmem, size = 0x40000, scoped, tag = 'input window, operand 3, single buffered']
    #allocation8 [shape = 'u8[131072]{0}', space=vmem, size = 0x20000, scoped, tag = 'input window, operand 5, single buffered']
    #allocation9 [shape = 's32[1]{0}', space=sflag, size = 0x4, scoped, tag = 'scoped memory for tpu_custom_call.1']
    #allocation10 [shape = 'u8[131072]{0}', space=vmem, size = 0x20000, scoped, tag = 'output window, operand 0']
    %12 = vsyncpa [#allocation3], 0
    %s13 = scalar_lea.sflag [#allocation3], 1
    %14 = vsyncpa %s13, 0
    %15 = vsyncpa [#allocation6], 0
    %16 = vsyncpa [#allocation9], 0
    %17 = vsyncpa [#allocation4], 0
    %s18 = scalar_lea.sflag [#allocation4], 1
    %19 = vsyncpa %s18, 0
    loop: start=0, step=1, limit=6
    $region2: #{tpu_custom_call.1} parent=1 // loop_pre_header
      _
    $region3: #{tpu_custom_call.1} parent=1 // loop_header
      %s21 = sphi 0, %s25
      %p22 = scmp.ge.s32.totalorder %s21, 6
      %s31 = sphi 0, %s33
      %s34 = sphi 0, %s31
      %s35 = sphi 0, %s34
      %s51 = sphi 0, %s35
      %s55 = sphi 0, %s55
      %s57 = sphi 0, %s55
      %s58 = sphi 0, %s57
      %s72 = sphi 0, %s58
      %s76 = sphi 0, %s76
      %s78 = sphi 0, %s76
      %s79 = sphi 0, %s78
      %s93 = sphi 0, %s79
      %s97 = sphi 0, %s97
      %s99 = sphi 0, %s97
      %s100 = sphi 0, %s99
      %s114 = sphi 0, %s100
      %s118 = sphi 0, %s118
      %s120 = sphi 0, %s118
      %s121 = sphi 0, %s120
      %s135 = sphi 0, %s121
      %s139 = sphi 0, %s139
      %s141 = sphi 0, %s139
      %s142 = sphi 0, %s141
      %s156 = sphi 0, %s142
      %s160 = sphi 0, %s160
      %s162 = sphi 0, %s160
      %s163 = sphi 0, %s162
      %s177 = sphi 0, %s163
      %s183 = sphi 0, %s185
      %s186 = sphi 0, %s183
      %s187 = sphi 0, %s186
      %s203 = sphi 0, %s187
    $region4: #{tpu_custom_call.1} parent=1 // loop_header_branch
      %24 = sbr.rel (%p22) target = $region8
    $region5: #{tpu_custom_call.1} parent=1 // loop_body
      %s26 = ssub.s32 %s21, 1
      %s27 = ssub.s32 %s21, 2
      %s28 = sadd.s32 %s21, 1
      %s29 = ssub.s32 %s21, %s28
      %p30 = scmp.eq.s32.totalorder %s29, 0
      %s32 = sadd.s32 %s31, 1
      %s33 = scalar_select %p30, %s31, %s32
      %p36 = pneg %p30
      %p37 = scmp.eq.s32.totalorder %s21, 3
      %p38 = por %p36, %p37
      %p39 = scmp.ne.s32.totalorder %s31, %s34
      %p40 = scmp.eq.s32.totalorder %s21, 0
      %p41 = por %p39, %p40
      %p42 = scmp.ne.s32.totalorder %s31, %s34
      %p43 = scmp.eq.s32.totalorder %s26, 3
      %p44 = por %p42, %p43
      %p45 = scmp.ne.s32.totalorder %s34, %s35
      %p46 = scmp.eq.s32.totalorder %s26, 0
      %p47 = por %p45, %p46
      %p48 = scmp.ne.s32.totalorder %s34, %s35
      %p49 = scmp.eq.s32.totalorder %s27, 3
      %p50 = por %p48, %p49
      %p52 = scmp.ne.s32.totalorder %s35, %s51
      %p53 = scmp.eq.s32.totalorder %s27, 0
      %p54 = por %p52, %p53
      %s56 = sadd.s32 %s55, 1
      %p59 = scmp.eq.s32.totalorder %s21, 3
      %p60 = scmp.ne.s32.totalorder %s55, %s57
      %p61 = scmp.eq.s32.totalorder %s21, 0
      %p62 = por %p60, %p61
      %p63 = scmp.ne.s32.totalorder %s55, %s57
      %p64 = scmp.eq.s32.totalorder %s26, 3
      %p65 = por %p63, %p64
      %p66 = scmp.ne.s32.totalorder %s57, %s58
      %p67 = scmp.eq.s32.totalorder %s26, 0
      %p68 = por %p66, %p67
      %p69 = scmp.ne.s32.totalorder %s57, %s58
      %p70 = scmp.eq.s32.totalorder %s27, 3
      %p71 = por %p69, %p70
      %p73 = scmp.ne.s32.totalorder %s58, %s72
      %p74 = scmp.eq.s32.totalorder %s27, 0
      %p75 = por %p73, %p74
      %s77 = sadd.s32 %s76, 1
      %p80 = scmp.eq.s32.totalorder %s21, 3
      %p81 = scmp.ne.s32.totalorder %s76, %s78
      %p82 = scmp.eq.s32.totalorder %s21, 0
      %p83 = por %p81, %p82
      %p84 = scmp.ne.s32.totalorder %s76, %s78
      %p85 = scmp.eq.s32.totalorder %s26, 3
      %p86 = por %p84, %p85
      %p87 = scmp.ne.s32.totalorder %s78, %s79
      %p88 = scmp.eq.s32.totalorder %s26, 0
      %p89 = por %p87, %p88
      %p90 = scmp.ne.s32.totalorder %s78, %s79
      %p91 = scmp.eq.s32.totalorder %s27, 3
      %p92 = por %p90, %p91
      %p94 = scmp.ne.s32.totalorder %s79, %s93
      %p95 = scmp.eq.s32.totalorder %s27, 0
      %p96 = por %p94, %p95
      %s98 = sadd.s32 %s97, 1
      %p101 = scmp.eq.s32.totalorder %s21, 3
      %p102 = scmp.ne.s32.totalorder %s97, %s99
      %p103 = scmp.eq.s32.totalorder %s21, 0
      %p104 = por %p102, %p103
      %p105 = scmp.ne.s32.totalorder %s97, %s99
      %p106 = scmp.eq.s32.totalorder %s26, 3
      %p107 = por %p105, %p106
      %p108 = scmp.ne.s32.totalorder %s99, %s100
      %p109 = scmp.eq.s32.totalorder %s26, 0
      %p110 = por %p108, %p109
      %p111 = scmp.ne.s32.totalorder %s99, %s100
      %p112 = scmp.eq.s32.totalorder %s27, 3
      %p113 = por %p111, %p112
      %p115 = scmp.ne.s32.totalorder %s100, %s114
      %p116 = scmp.eq.s32.totalorder %s27, 0
      %p117 = por %p115, %p116
      %s119 = sadd.s32 %s118, 1
      %p122 = scmp.eq.s32.totalorder %s21, 3
      %p123 = scmp.ne.s32.totalorder %s118, %s120
      %p124 = scmp.eq.s32.totalorder %s21, 0
      %p125 = por %p123, %p124
      %p126 = scmp.ne.s32.totalorder %s118, %s120
      %p127 = scmp.eq.s32.totalorder %s26, 3
      %p128 = por %p126, %p127
      %p129 = scmp.ne.s32.totalorder %s120, %s121
      %p130 = scmp.eq.s32.totalorder %s26, 0
      %p131 = por %p129, %p130
      %p132 = scmp.ne.s32.totalorder %s120, %s121
      %p133 = scmp.eq.s32.totalorder %s27, 3
      %p134 = por %p132, %p133
      %p136 = scmp.ne.s32.totalorder %s121, %s135
      %p137 = scmp.eq.s32.totalorder %s27, 0
      %p138 = por %p136, %p137
      %s140 = sadd.s32 %s139, 1
      %p143 = scmp.eq.s32.totalorder %s21, 3
      %p144 = scmp.ne.s32.totalorder %s139, %s141
      %p145 = scmp.eq.s32.totalorder %s21, 0
      %p146 = por %p144, %p145
      %p147 = scmp.ne.s32.totalorder %s139, %s141
      %p148 = scmp.eq.s32.totalorder %s26, 3
      %p149 = por %p147, %p148
      %p150 = scmp.ne.s32.totalorder %s141, %s142
      %p151 = scmp.eq.s32.totalorder %s26, 0
      %p152 = por %p150, %p151
      %p153 = scmp.ne.s32.totalorder %s141, %s142
      %p154 = scmp.eq.s32.totalorder %s27, 3
      %p155 = por %p153, %p154
      %p157 = scmp.ne.s32.totalorder %s142, %s156
      %p158 = scmp.eq.s32.totalorder %s27, 0
      %p159 = por %p157, %p158
      %s161 = sadd.s32 %s160, 1
      %p164 = scmp.eq.s32.totalorder %s21, 3
      %p165 = scmp.ne.s32.totalorder %s160, %s162
      %p166 = scmp.eq.s32.totalorder %s21, 0
      %p167 = por %p165, %p166
      %p168 = scmp.ne.s32.totalorder %s160, %s162
      %p169 = scmp.eq.s32.totalorder %s26, 3
      %p170 = por %p168, %p169
      %p171 = scmp.ne.s32.totalorder %s162, %s163
      %p172 = scmp.eq.s32.totalorder %s26, 0
      %p173 = por %p171, %p172
      %p174 = scmp.ne.s32.totalorder %s162, %s163
      %p175 = scmp.eq.s32.totalorder %s27, 3
      %p176 = por %p174, %p175
      %p178 = scmp.ne.s32.totalorder %s163, %s177
      %p179 = scmp.eq.s32.totalorder %s27, 0
      %p180 = por %p178, %p179
      %s181 = ssub.s32 %s21, %s28
      %p182 = scmp.eq.s32.totalorder %s181, 0
      %s184 = sadd.s32 %s183, 1
      %s185 = scalar_select %p182, %s183, %s184
      %p188 = pneg %p182
      %p189 = scmp.eq.s32.totalorder %s21, 3
      %p190 = por %p188, %p189
      %p191 = scmp.ne.s32.totalorder %s183, %s186
      %p192 = scmp.eq.s32.totalorder %s21, 0
      %p193 = por %p191, %p192
      %p194 = scmp.ne.s32.totalorder %s183, %s186
      %p195 = scmp.eq.s32.totalorder %s26, 3
      %p196 = por %p194, %p195
      %p197 = scmp.ne.s32.totalorder %s186, %s187
      %p198 = scmp.eq.s32.totalorder %s26, 0
      %p199 = por %p197, %p198
      %p200 = scmp.ne.s32.totalorder %s186, %s187
      %p201 = scmp.eq.s32.totalorder %s27, 3
      %p202 = por %p200, %p201
      %p204 = scmp.ne.s32.totalorder %s187, %s203
      %p205 = scmp.eq.s32.totalorder %s27, 0
      %p206 = por %p204, %p205
      %p207 = scmp.le.s32.totalorder 1, %s21
      %p208 = scmp.lt.s32.totalorder %s21, 5
      %p209 = pnand %p207, %p208
      %p210 = pneg %p209
      // Predicated region
      $region9: #{tpu_custom_call.1} parent=5 // pred_check
        _
      $region10: #{tpu_custom_call.1} parent=5 // pred_check_branch
        %212 = sbr.rel (%p209) target = $region12
      $region11: #{tpu_custom_call.1} parent=5 // pred_region
        %s213 = ssub.s32 %s21, 1
        // Predicated region
        $region13: #{tpu_custom_call.1} parent=11 // pred_check
          %p214 = pneg %p68
        $region14: #{tpu_custom_call.1} parent=11 // pred_check_branch
          %216 = sbr.rel (%p214) target = $region16
        $region15: #{tpu_custom_call.1} parent=11 // pred_region
          %s218 = ssub.s32 4096, 4096
          %219 = vsyncadd [#allocation6], %s218
          %s220 = sshll.u32 [#allocation5], 4
          %s221 = int_to_ptr.vmem [resolvable:$true] %s220
          %226 = dma.hbm_to_vmem [thread:$0]  %s1, 4096, %s221, [#allocation6], 256, 256, 16
        $region16: #{tpu_custom_call.1} parent=11 // pred_fallthru
          _
        // Predicated region
        $region17: #{tpu_custom_call.1} parent=11 // pred_check
          %p227 = pneg %p89
        $region18: #{tpu_custom_call.1} parent=11 // pred_check_branch
          %229 = sbr.rel (%p227) target = $region20
        $region19: #{tpu_custom_call.1} parent=11 // pred_region
          _
        $region20: #{tpu_custom_call.1} parent=11 // pred_fallthru
          _
        // Predicated region
        $region21: #{tpu_custom_call.1} parent=11 // pred_check
          %p230 = pneg %p110
        $region22: #{tpu_custom_call.1} parent=11 // pred_check_branch
          %232 = sbr.rel (%p230) target = $region24
        $region23: #{tpu_custom_call.1} parent=11 // pred_region
          %s234 = ssub.s32 8192, 8192
          %235 = vsyncadd [#allocation6], %s234
          %s236 = sshll.u32 [#allocation7], 4
          %s237 = int_to_ptr.vmem [resolvable:$true] %s236
          %242 = dma.hbm_to_vmem [thread:$0]  %s3, 8192, %s237, [#allocation6], 256, 256, 16
        $region24: #{tpu_custom_call.1} parent=11 // pred_fallthru
          _
        // Predicated region
        $region25: #{tpu_custom_call.1} parent=11 // pred_check
          %p243 = pneg %p131
        $region26: #{tpu_custom_call.1} parent=11 // pred_check_branch
          %245 = sbr.rel (%p243) target = $region28
        $region27: #{tpu_custom_call.1} parent=11 // pred_region
          _
        $region28: #{tpu_custom_call.1} parent=11 // pred_fallthru
          _
        // Predicated region
        $region29: #{tpu_custom_call.1} parent=11 // pred_check
          %p246 = pneg %p152
        $region30: #{tpu_custom_call.1} parent=11 // pred_check_branch
          %248 = sbr.rel (%p246) target = $region32
        $region31: #{tpu_custom_call.1} parent=11 // pred_region
          %s250 = ssub.s32 4096, 4096
          %251 = vsyncadd [#allocation9], %s250
          %s252 = sshll.u32 [#allocation8], 4
          %s253 = int_to_ptr.vmem [resolvable:$true] %s252
          %258 = dma.hbm_to_vmem [thread:$0]  %s5, 4096, %s253, [#allocation9], 128, 128, 8
        $region32: #{tpu_custom_call.1} parent=11 // pred_fallthru
          _
        // Predicated region
        $region33: #{tpu_custom_call.1} parent=11 // pred_check
          %p259 = pneg %p173
        $region34: #{tpu_custom_call.1} parent=11 // pred_check_branch
          %261 = sbr.rel (%p259) target = $region36
        $region35: #{tpu_custom_call.1} parent=11 // pred_region
          _
        $region36: #{tpu_custom_call.1} parent=11 // pred_fallthru
          _
      $region12: #{tpu_custom_call.1} parent=5 // pred_fallthru
        _
      %p262 = scmp.lt.s32.totalorder %s21, 4
      // Predicated region
      $region37: #{tpu_custom_call.1} parent=5 // pred_check
        %p263 = pneg %p262
      $region38: #{tpu_custom_call.1} parent=5 // pred_check_branch
        %265 = sbr.rel (%p263) target = $region40
      $region39: #{tpu_custom_call.1} parent=5 // pred_region
        // Predicated region
        $region41: #{tpu_custom_call.1} parent=39 // pred_check
          %p266 = pneg %p41
        $region42: #{tpu_custom_call.1} parent=39 // pred_check_branch
          %268 = sbr.rel (%p266) target = $region44
        $region43: #{tpu_custom_call.1} parent=39 // pred_region
          %s269 = sand.u32 %s31, 1
          %s270 = scalar_lea.sflag [#allocation3], %s269
          %s271 = sand.u32 %s31, 1
          %s272 = smul.addr %s271, 128
          %s273 = scalar_lea.vmem [#allocation2], %s272
          %s274 = smul.u32 16, %s21
          %s276 = ssub.s32 2048, 2048
          %277 = vsyncadd %s270, %s276
          %s278 = smul.addr %s274, 128
          %s279 = scalar_lea.hbm %s0, %s278
          %s280 = sshll.u32 %s273, 4
          %s281 = int_to_ptr.vmem [resolvable:$true] %s280
          %286 = dma.hbm_to_vmem [thread:$0]  %s279, 2048, %s281, %s270, 128, 128, 8
        $region44: #{tpu_custom_call.1} parent=39 // pred_fallthru
          _
      $region40: #{tpu_custom_call.1} parent=5 // pred_fallthru
        _
      %p287 = scmp.le.s32.totalorder 1, %s21
      %p288 = scmp.lt.s32.totalorder %s21, 5
      %p289 = pnand %p287, %p288
      %p290 = pneg %p289
      // Predicated region
      $region45: #{tpu_custom_call.1} parent=5 // pred_check
        _
      $region46: #{tpu_custom_call.1} parent=5 // pred_check_branch
        %292 = sbr.rel (%p289) target = $region48
      $region47: #{tpu_custom_call.1} parent=5 // pred_region
        %s293 = ssub.s32 %s21, 1
        %s294 = sand.u32 %s34, 1
        %s295 = scalar_lea.sflag [#allocation3], %s294
        %s296 = sand.u32 %s34, 1
        %s297 = smul.addr %s296, 128
        %s298 = scalar_lea.vmem [#allocation2], %s297
        // Predicated region
        $region49: #{tpu_custom_call.1} parent=47 // pred_check
          %p299 = pneg %p47
        $region50: #{tpu_custom_call.1} parent=47 // pred_check_branch
          %301 = sbr.rel (%p299) target = $region52
        $region51: #{tpu_custom_call.1} parent=47 // pred_region
          %302 = dma.done %s295, 2048
        $region52: #{tpu_custom_call.1} parent=47 // pred_fallthru
          _
        // Predicated region
        $region53: #{tpu_custom_call.1} parent=47 // pred_check
          %p303 = pneg %p68
        $region54: #{tpu_custom_call.1} parent=47 // pred_check_branch
          %305 = sbr.rel (%p303) target = $region56
        $region55: #{tpu_custom_call.1} parent=47 // pred_region
          %306 = dma.done [#allocation6], 4096
        $region56: #{tpu_custom_call.1} parent=47 // pred_fallthru
          _
        // Predicated region
        $region57: #{tpu_custom_call.1} parent=47 // pred_check
          %p307 = pneg %p110
        $region58: #{tpu_custom_call.1} parent=47 // pred_check_branch
          %309 = sbr.rel (%p307) target = $region60
        $region59: #{tpu_custom_call.1} parent=47 // pred_region
          %310 = dma.done [#allocation6], 8192
        $region60: #{tpu_custom_call.1} parent=47 // pred_fallthru
          _
        // Predicated region
        $region61: #{tpu_custom_call.1} parent=47 // pred_check
          %p311 = pneg %p152
        $region62: #{tpu_custom_call.1} parent=47 // pred_check_branch
          %313 = sbr.rel (%p311) target = $region64
        $region63: #{tpu_custom_call.1} parent=47 // pred_region
          %314 = dma.done [#allocation9], 4096
        $region64: #{tpu_custom_call.1} parent=47 // pred_fallthru
          _
        %s315 = sand.u32 %s34, 1
        %s316 = scalar_lea.sflag [#allocation3], %s315
        %s317 = sand.u32 %s34, 1
        %s318 = smul.addr %s317, 128
        %s319 = scalar_lea.vmem [#allocation2], %s318
        %p320 = pneg %p47
        %p321 = pneg %p44
        %p322 = pneg %p68
        %p323 = pneg %p65
        %p324 = pneg %p89
        %p325 = pneg %p86
        %p326 = pneg %p110
        %p327 = pneg %p107
        %p328 = pneg %p131
        %p329 = pneg %p128
        %p330 = pneg %p152
        %p331 = pneg %p149
        %p332 = pneg %p173
        %p333 = pneg %p170
        %p334 = pneg %p199
        %p335 = pneg %p196
        %s336 = sand.u32 %s186, 1
        %s337 = scalar_lea.sflag [#allocation4], %s336
        %s338 = sand.u32 %s186, 1
        %s339 = smul.addr %s338, 128
        %s340 = scalar_lea.vmem [#allocation10], %s339
        %s341 = smul.u32 16, %s26
        %s342 = smul.u32 16, %s26
        %v343 = vld [vmem:[%s298] sm:$0xff]
        %v344 = vld [vmem:[%s298 + $0x8] sm:$0xff]
        %v345 = vld [vmem:[%s298 + $0x10] sm:$0xff]
        %v346 = vld [vmem:[%s298 + $0x18] sm:$0xff]
        %v347 = vld [vmem:[%s298 + $0x20] sm:$0xff]
        %v348 = vld [vmem:[%s298 + $0x28] sm:$0xff]
        %v349 = vld [vmem:[%s298 + $0x30] sm:$0xff]
        %v350 = vld [vmem:[%s298 + $0x38] sm:$0xff]
        %v351 = vld [vmem:[%s298 + $0x40] sm:$0xff]
        %v352 = vld [vmem:[%s298 + $0x48] sm:$0xff]
        %v353 = vld [vmem:[%s298 + $0x50] sm:$0xff]
        %v354 = vld [vmem:[%s298 + $0x58] sm:$0xff]
        %v355 = vld [vmem:[%s298 + $0x60] sm:$0xff]
        %v356 = vld [vmem:[%s298 + $0x68] sm:$0xff]
        %v357 = vld [vmem:[%s298 + $0x70] sm:$0xff]
        %v358 = vld [vmem:[%s298 + $0x78] sm:$0xff]
        %v359 = vld [vmem:[#allocation5] sm:$0xff]
        %v360 = vld [vmem:[#allocation5 + $0x8] sm:$0xff]
        %v361 = vld [vmem:[#allocation5 + $0x10] sm:$0xff]
        %v362 = vld [vmem:[#allocation5 + $0x18] sm:$0xff]
        %v363 = vld [vmem:[#allocation5 + $0x20] sm:$0xff]
        %v364 = vld [vmem:[#allocation5 + $0x28] sm:$0xff]
        %v365 = vld [vmem:[#allocation5 + $0x30] sm:$0xff]
        %v366 = vld [vmem:[#allocation5 + $0x38] sm:$0xff]
        %v367 = vld [vmem:[#allocation5 + $0x40] sm:$0xff]
        %v368 = vld [vmem:[#allocation5 + $0x48] sm:$0xff]
        %v369 = vld [vmem:[#allocation5 + $0x50] sm:$0xff]
        %v370 = vld [vmem:[#allocation5 + $0x58] sm:$0xff]
        %v371 = vld [vmem:[#allocation5 + $0x60] sm:$0xff]
        %v372 = vld [vmem:[#allocation5 + $0x68] sm:$0xff]
        %v373 = vld [vmem:[#allocation5 + $0x70] sm:$0xff]
        %v374 = vld [vmem:[#allocation5 + $0x78] sm:$0xff]
        %v375 = vld [vmem:[#allocation5 + $0x80] sm:$0xff]
        %v376 = vld [vmem:[#allocation5 + $0x88] sm:$0xff]
        %v377 = vld [vmem:[#allocation5 + $0x90] sm:$0xff]
        %v378 = vld [vmem:[#allocation5 + $0x98] sm:$0xff]
        %v379 = vld [vmem:[#allocation5 + $0xa0] sm:$0xff]
        %v380 = vld [vmem:[#allocation5 + $0xa8] sm:$0xff]
        %v381 = vld [vmem:[#allocation5 + $0xb0] sm:$0xff]
        %v382 = vld [vmem:[#allocation5 + $0xb8] sm:$0xff]
        %v383 = vld [vmem:[#allocation5 + $0xc0] sm:$0xff]
        %v384 = vld [vmem:[#allocation5 + $0xc8] sm:$0xff]
        %v385 = vld [vmem:[#allocation5 + $0xd0] sm:$0xff]
        %v386 = vld [vmem:[#allocation5 + $0xd8] sm:$0xff]
        %v387 = vld [vmem:[#allocation5 + $0xe0] sm:$0xff]
        %v388 = vld [vmem:[#allocation5 + $0xe8] sm:$0xff]
        %v389 = vld [vmem:[#allocation5 + $0xf0] sm:$0xff]
        %v390 = vld [vmem:[#allocation5 + $0xf8] sm:$0xff]
        %v391 = vld [vmem:[%s2] sm:$0x3]
        %v393 = vlaneseq
        %v394 = vshrl.u32 %v393, 7
        %v395 = vsub.s32 0, %v394
        %v396 = vrot.slane %v391, %v395
        %v397 = vlaneseq
        %v398 = vshrl.u32 %v397, 7
        %v399 = vsub.s32 1, %v398
        %v400 = vrot.slane %v391, %v399
        %403 = vmatprep.subr.mxu0 %v390
        %404 = vmatpush1.msra.mxu0 %v389
        %405 = vmatprep.subr.mxu0 %v388
        %406 = vmatpush1.msra.mxu0 %v387
        %407 = vmatprep.subr.mxu0 %v386
        %408 = vmatpush1.msra.mxu0 %v385
        %409 = vmatprep.subr.mxu0 %v384
        %410 = vmatpush1.msra.mxu0 %v383
        %411 = vmatprep.subr.mxu0 %v382
        %412 = vmatpush1.msra.mxu0 %v381
        %413 = vmatprep.subr.mxu0 %v380
        %414 = vmatpush1.msra.mxu0 %v379
        %415 = vmatprep.subr.mxu0 %v378
        %416 = vmatpush1.msra.mxu0 %v377
        %417 = vmatprep.subr.mxu0 %v376
        %418 = vmatpush1.msra.mxu0 %v375
        %419 = vmatprep.subr.mxu0 %v374
        %420 = vmatpush1.msra.mxu0 %v373
        %421 = vmatprep.subr.mxu0 %v372
        %422 = vmatpush1.msra.mxu0 %v371
        %423 = vmatprep.subr.mxu0 %v370
        %424 = vmatpush1.msra.mxu0 %v369
        %425 = vmatprep.subr.mxu0 %v368
        %426 = vmatpush1.msra.mxu0 %v367
        %427 = vmatprep.subr.mxu0 %v366
        %428 = vmatpush1.msra.mxu0 %v365
        %429 = vmatprep.subr.mxu0 %v364
        %430 = vmatpush1.msra.mxu0 %v363
        %431 = vmatprep.subr.mxu0 %v362
        %432 = vmatpush1.msra.mxu0 %v361
        %433 = vmatprep.subr.mxu0 %v360
        %434 = vmatpush1.msra.mxu0 %v359
        %435 = vmatprep.subr.mxu0 0.0
        %436 = vmatpush2.msra.mxu0 0.0
        %437 = vmatprep.subr.mxu0 0.0
        %438 = vmatpush2.msra.mxu0 0.0
        %439 = vmatprep.subr.mxu0 0.0
        %440 = vmatpush2.msra.mxu0 0.0
        %441 = vmatprep.subr.mxu0 0.0
        %442 = vmatpush2.msra.mxu0 0.0
        %443 = vmatprep.subr.mxu0 0.0
        %444 = vmatpush2.msra.mxu0 0.0
        %445 = vmatprep.subr.mxu0 0.0
        %446 = vmatpush2.msra.mxu0 0.0
        %447 = vmatprep.subr.mxu0 0.0
        %448 = vmatpush2.msra.mxu0 0.0
        %449 = vmatprep.subr.mxu0 0.0
        %450 = vmatpush2.msra.mxu0 0.0
        %451 = vmatprep.subr.mxu0 0.0
        %452 = vmatpush2.msra.mxu0 0.0
        %453 = vmatprep.subr.mxu0 0.0
        %454 = vmatpush2.msra.mxu0 0.0
        %455 = vmatprep.subr.mxu0 0.0
        %456 = vmatpush2.msra.mxu0 0.0
        %457 = vmatprep.subr.mxu0 0.0
        %458 = vmatpush2.msra.mxu0 0.0
        %459 = vmatprep.subr.mxu0 0.0
        %460 = vmatpush2.msra.mxu0 0.0
        %461 = vmatprep.subr.mxu0 0.0
        %462 = vmatpush2.msra.mxu0 0.0
        %463 = vmatprep.subr.mxu0 0.0
        %464 = vmatpush2.msra.mxu0 0.0
        %465 = vmatprep.subr.mxu0 0.0
        %466 = vmatpush2.msra.mxu0 0.0
        %467 = vmatprep.mubr.f32.mxu0 0.0
        %468 = vmatmul.mubr.f32.gmra.mxu0 %v343
        %v469 = vpop.f32.mrf.mxu0
        %v470 = vadd.f32 %v396, %v469
        %v471 = vpop.f32.mrf.mxu0
        %v472 = vadd.f32 %v400, %v471
        %473 = vmatprep.mubr.f32.mxu0 0.0
        %474 = vmatmul.mubr.f32.gmra.mxu0 %v344
        %v475 = vpop.f32.mrf.mxu0
        %v476 = vadd.f32 %v396, %v475
        %v477 = vpop.f32.mrf.mxu0
        %v478 = vadd.f32 %v400, %v477
        %479 = vmatprep.mubr.f32.mxu0 0.0
        %480 = vmatmul.mubr.f32.gmra.mxu0 %v345
        %v481 = vpop.f32.mrf.mxu0
        %v482 = vadd.f32 %v396, %v481
        %v483 = vpop.f32.mrf.mxu0
        %v484 = vadd.f32 %v400, %v483
        %485 = vmatprep.mubr.f32.mxu0 0.0
        %486 = vmatmul.mubr.f32.gmra.mxu0 %v346
        %v487 = vpop.f32.mrf.mxu0
        %v488 = vadd.f32 %v396, %v487
        %v489 = vpop.f32.mrf.mxu0
        %v490 = vadd.f32 %v400, %v489
        %491 = vmatprep.mubr.f32.mxu0 0.0
        %492 = vmatmul.mubr.f32.gmra.mxu0 %v347
        %v493 = vpop.f32.mrf.mxu0
        %v494 = vadd.f32 %v396, %v493
        %v495 = vpop.f32.mrf.mxu0
        %v496 = vadd.f32 %v400, %v495
        %497 = vmatprep.mubr.f32.mxu0 0.0
        %498 = vmatmul.mubr.f32.gmra.mxu0 %v348
        %v499 = vpop.f32.mrf.mxu0
        %v500 = vadd.f32 %v396, %v499
        %v501 = vpop.f32.mrf.mxu0
        %v502 = vadd.f32 %v400, %v501
        %503 = vmatprep.mubr.f32.mxu0 0.0
        %504 = vmatmul.mubr.f32.gmra.mxu0 %v349
        %v505 = vpop.f32.mrf.mxu0
        %v506 = vadd.f32 %v396, %v505
        %v507 = vpop.f32.mrf.mxu0
        %v508 = vadd.f32 %v400, %v507
        %509 = vmatprep.mubr.f32.mxu0 0.0
        %510 = vmatmul.mubr.f32.gmra.mxu0 %v350
        %v511 = vpop.f32.mrf.mxu0
        %v512 = vadd.f32 %v396, %v511
        %v513 = vpop.f32.mrf.mxu0
        %v514 = vadd.f32 %v400, %v513
        %515 = vmatprep.mubr.f32.mxu0 0.0
        %516 = vmatmul.mubr.f32.gmra.mxu0 %v351
        %v517 = vpop.f32.mrf.mxu0
        %v518 = vadd.f32 %v396, %v517
        %v519 = vpop.f32.mrf.mxu0
        %v520 = vadd.f32 %v400, %v519
        %521 = vmatprep.mubr.f32.mxu0 0.0
        %522 = vmatmul.mubr.f32.gmra.mxu0 %v352
        %v523 = vpop.f32.mrf.mxu0
        %v524 = vadd.f32 %v396, %v523
        %v525 = vpop.f32.mrf.mxu0
        %v526 = vadd.f32 %v400, %v525
        %527 = vmatprep.mubr.f32.mxu0 0.0
        %528 = vmatmul.mubr.f32.gmra.mxu0 %v353
        %v529 = vpop.f32.mrf.mxu0
        %v530 = vadd.f32 %v396, %v529
        %v531 = vpop.f32.mrf.mxu0
        %v532 = vadd.f32 %v400, %v531
        %533 = vmatprep.mubr.f32.mxu0 0.0
        %534 = vmatmul.mubr.f32.gmra.mxu0 %v354
        %v535 = vpop.f32.mrf.mxu0
        %v536 = vadd.f32 %v396, %v535
        %v537 = vpop.f32.mrf.mxu0
        %v538 = vadd.f32 %v400, %v537
        %539 = vmatprep.mubr.f32.mxu0 0.0
        %540 = vmatmul.mubr.f32.gmra.mxu0 %v355
        %v541 = vpop.f32.mrf.mxu0
        %v542 = vadd.f32 %v396, %v541
        %v543 = vpop.f32.mrf.mxu0
        %v544 = vadd.f32 %v400, %v543
        %545 = vmatprep.mubr.f32.mxu0 0.0
        %546 = vmatmul.mubr.f32.gmra.mxu0 %v356
        %v547 = vpop.f32.mrf.mxu0
        %v548 = vadd.f32 %v396, %v547
        %v549 = vpop.f32.mrf.mxu0
        %v550 = vadd.f32 %v400, %v549
        %551 = vmatprep.mubr.f32.mxu0 0.0
        %552 = vmatmul.mubr.f32.gmra.mxu0 %v357
        %v553 = vpop.f32.mrf.mxu0
        %v554 = vadd.f32 %v396, %v553
        %v555 = vpop.f32.mrf.mxu0
        %v556 = vadd.f32 %v400, %v555
        %557 = vmatprep.mubr.f32.mxu0 0.0
        %558 = vmatmul.mubr.f32.gmra.mxu0 %v358
        %v559 = vpop.f32.mrf.mxu0
        %v560 = vadd.f32 %v396, %v559
        %v561 = vpop.f32.mrf.mxu0
        %v562 = vadd.f32 %v400, %v561
        %563 = vdwg.mxu0
        %v564 = vmax.f32 %v470, 0.0
        %v565 = vmax.f32 %v472, 0.0
        %v566 = vmax.f32 %v476, 0.0
        %v567 = vmax.f32 %v478, 0.0
        %v568 = vmax.f32 %v482, 0.0
        %v569 = vmax.f32 %v484, 0.0
        %v570 = vmax.f32 %v488, 0.0
        %v571 = vmax.f32 %v490, 0.0
        %v572 = vmax.f32 %v494, 0.0
        %v573 = vmax.f32 %v496, 0.0
        %v574 = vmax.f32 %v500, 0.0
        %v575 = vmax.f32 %v502, 0.0
        %v576 = vmax.f32 %v506, 0.0
        %v577 = vmax.f32 %v508, 0.0
        %v578 = vmax.f32 %v512, 0.0
        %v579 = vmax.f32 %v514, 0.0
        %v580 = vmax.f32 %v518, 0.0
        %v581 = vmax.f32 %v520, 0.0
        %v582 = vmax.f32 %v524, 0.0
        %v583 = vmax.f32 %v526, 0.0
        %v584 = vmax.f32 %v530, 0.0
        %v585 = vmax.f32 %v532, 0.0
        %v586 = vmax.f32 %v536, 0.0
        %v587 = vmax.f32 %v538, 0.0
        %v588 = vmax.f32 %v542, 0.0
        %v589 = vmax.f32 %v544, 0.0
        %v590 = vmax.f32 %v548, 0.0
        %v591 = vmax.f32 %v550, 0.0
        %v592 = vmax.f32 %v554, 0.0
        %v593 = vmax.f32 %v556, 0.0
        %v594 = vmax.f32 %v560, 0.0
        %v595 = vmax.f32 %v562, 0.0
        %v596 = vld [vmem:[#allocation7] sm:$0xff]
        %v597 = vld [vmem:[#allocation7 + $0x8] sm:$0xff]
        %v598 = vld [vmem:[#allocation7 + $0x10] sm:$0xff]
        %v599 = vld [vmem:[#allocation7 + $0x18] sm:$0xff]
        %v600 = vld [vmem:[#allocation7 + $0x20] sm:$0xff]
        %v601 = vld [vmem:[#allocation7 + $0x28] sm:$0xff]
        %v602 = vld [vmem:[#allocation7 + $0x30] sm:$0xff]
        %v603 = vld [vmem:[#allocation7 + $0x38] sm:$0xff]
        %v604 = vld [vmem:[#allocation7 + $0x40] sm:$0xff]
        %v605 = vld [vmem:[#allocation7 + $0x48] sm:$0xff]
        %v606 = vld [vmem:[#allocation7 + $0x50] sm:$0xff]
        %v607 = vld [vmem:[#allocation7 + $0x58] sm:$0xff]
        %v608 = vld [vmem:[#allocation7 + $0x60] sm:$0xff]
        %v609 = vld [vmem:[#allocation7 + $0x68] sm:$0xff]
        %v610 = vld [vmem:[#allocation7 + $0x70] sm:$0xff]
        %v611 = vld [vmem:[#allocation7 + $0x78] sm:$0xff]
        %v612 = vld [vmem:[#allocation7 + $0x80] sm:$0xff]
        %v613 = vld [vmem:[#allocation7 + $0x88] sm:$0xff]
        %v614 = vld [vmem:[#allocation7 + $0x90] sm:$0xff]
        %v615 = vld [vmem:[#allocation7 + $0x98] sm:$0xff]
        %v616 = vld [vmem:[#allocation7 + $0xa0] sm:$0xff]
        %v617 = vld [vmem:[#allocation7 + $0xa8] sm:$0xff]
        %v618 = vld [vmem:[#allocation7 + $0xb0] sm:$0xff]
        %v619 = vld [vmem:[#allocation7 + $0xb8] sm:$0xff]
        %v620 = vld [vmem:[#allocation7 + $0xc0] sm:$0xff]
        %v621 = vld [vmem:[#allocation7 + $0xc8] sm:$0xff]
        %v622 = vld [vmem:[#allocation7 + $0xd0] sm:$0xff]
        %v623 = vld [vmem:[#allocation7 + $0xd8] sm:$0xff]
        %v624 = vld [vmem:[#allocation7 + $0xe0] sm:$0xff]
        %v625 = vld [vmem:[#allocation7 + $0xe8] sm:$0xff]
        %v626 = vld [vmem:[#allocation7 + $0xf0] sm:$0xff]
        %v627 = vld [vmem:[#allocation7 + $0xf8] sm:$0xff]
        %v628 = vld [vmem:[#allocation7 + $0x100] sm:$0xff]
        %v629 = vld [vmem:[#allocation7 + $0x108] sm:$0xff]
        %v630 = vld [vmem:[#allocation7 + $0x110] sm:$0xff]
        %v631 = vld [vmem:[#allocation7 + $0x118] sm:$0xff]
        %v632 = vld [vmem:[#allocation7 + $0x120] sm:$0xff]
        %v633 = vld [vmem:[#allocation7 + $0x128] sm:$0xff]
        %v634 = vld [vmem:[#allocation7 + $0x130] sm:$0xff]
        %v635 = vld [vmem:[#allocation7 + $0x138] sm:$0xff]
        %v636 = vld [vmem:[#allocation7 + $0x140] sm:$0xff]
        %v637 = vld [vmem:[#allocation7 + $0x148] sm:$0xff]
        %v638 = vld [vmem:[#allocation7 + $0x150] sm:$0xff]
        %v639 = vld [vmem:[#allocation7 + $0x158] sm:$0xff]
        %v640 = vld [vmem:[#allocation7 + $0x160] sm:$0xff]
        %v641 = vld [vmem:[#allocation7 + $0x168] sm:$0xff]
        %v642 = vld [vmem:[#allocation7 + $0x170] sm:$0xff]
        %v643 = vld [vmem:[#allocation7 + $0x178] sm:$0xff]
        %v644 = vld [vmem:[#allocation7 + $0x180] sm:$0xff]
        %v645 = vld [vmem:[#allocation7 + $0x188] sm:$0xff]
        %v646 = vld [vmem:[#allocation7 + $0x190] sm:$0xff]
        %v647 = vld [vmem:[#allocation7 + $0x198] sm:$0xff]
        %v648 = vld [vmem:[#allocation7 + $0x1a0] sm:$0xff]
        %v649 = vld [vmem:[#allocation7 + $0x1a8] sm:$0xff]
        %v650 = vld [vmem:[#allocation7 + $0x1b0] sm:$0xff]
        %v651 = vld [vmem:[#allocation7 + $0x1b8] sm:$0xff]
        %v652 = vld [vmem:[#allocation7 + $0x1c0] sm:$0xff]
        %v653 = vld [vmem:[#allocation7 + $0x1c8] sm:$0xff]
        %v654 = vld [vmem:[#allocation7 + $0x1d0] sm:$0xff]
        %v655 = vld [vmem:[#allocation7 + $0x1d8] sm:$0xff]
        %v656 = vld [vmem:[#allocation7 + $0x1e0] sm:$0xff]
        %v657 = vld [vmem:[#allocation7 + $0x1e8] sm:$0xff]
        %v658 = vld [vmem:[#allocation7 + $0x1f0] sm:$0xff]
        %v659 = vld [vmem:[#allocation7 + $0x1f8] sm:$0xff]
        %v660 = vld [vmem:[%s4] sm:$0x3]
        %v662 = vlaneseq
        %v663 = vshrl.u32 %v662, 7
        %v664 = vsub.s32 0, %v663
        %v665 = vrot.slane %v660, %v664
        %v666 = vlaneseq
        %v667 = vshrl.u32 %v666, 7
        %v668 = vsub.s32 1, %v667
        %v669 = vrot.slane %v660, %v668
        %672 = vmatprep.subr.mxu0 %v627
        %673 = vmatpush1.msra.mxu0 %v626
        %674 = vmatprep.subr.mxu0 %v625
        %675 = vmatpush1.msra.mxu0 %v624
        %676 = vmatprep.subr.mxu0 %v623
        %677 = vmatpush1.msra.mxu0 %v622
        %678 = vmatprep.subr.mxu0 %v621
        %679 = vmatpush1.msra.mxu0 %v620
        %680 = vmatprep.subr.mxu0 %v619
        %681 = vmatpush1.msra.mxu0 %v618
        %682 = vmatprep.subr.mxu0 %v617
        %683 = vmatpush1.msra.mxu0 %v616
        %684 = vmatprep.subr.mxu0 %v615
        %685 = vmatpush1.msra.mxu0 %v614
        %686 = vmatprep.subr.mxu0 %v613
        %687 = vmatpush1.msra.mxu0 %v612
        %688 = vmatprep.subr.mxu0 %v611
        %689 = vmatpush1.msra.mxu0 %v610
        %690 = vmatprep.subr.mxu0 %v609
        %691 = vmatpush1.msra.mxu0 %v608
        %692 = vmatprep.subr.mxu0 %v607
        %693 = vmatpush1.msra.mxu0 %v606
        %694 = vmatprep.subr.mxu0 %v605
        %695 = vmatpush1.msra.mxu0 %v604
        %696 = vmatprep.subr.mxu0 %v603
        %697 = vmatpush1.msra.mxu0 %v602
        %698 = vmatprep.subr.mxu0 %v601
        %699 = vmatpush1.msra.mxu0 %v600
        %700 = vmatprep.subr.mxu0 %v599
        %701 = vmatpush1.msra.mxu0 %v598
        %702 = vmatprep.subr.mxu0 %v597
        %703 = vmatpush1.msra.mxu0 %v596
        %704 = vmatprep.subr.mxu0 %v659
        %705 = vmatpush2.msra.mxu0 %v658
        %706 = vmatprep.subr.mxu0 %v657
        %707 = vmatpush2.msra.mxu0 %v656
        %708 = vmatprep.subr.mxu0 %v655
        %709 = vmatpush2.msra.mxu0 %v654
        %710 = vmatprep.subr.mxu0 %v653
        %711 = vmatpush2.msra.mxu0 %v652
        %712 = vmatprep.subr.mxu0 %v651
        %713 = vmatpush2.msra.mxu0 %v650
        %714 = vmatprep.subr.mxu0 %v649
        %715 = vmatpush2.msra.mxu0 %v648
        %716 = vmatprep.subr.mxu0 %v647
        %717 = vmatpush2.msra.mxu0 %v646
        %718 = vmatprep.subr.mxu0 %v645
        %719 = vmatpush2.msra.mxu0 %v644
        %720 = vmatprep.subr.mxu0 %v643
        %721 = vmatpush2.msra.mxu0 %v642
        %722 = vmatprep.subr.mxu0 %v641
        %723 = vmatpush2.msra.mxu0 %v640
        %724 = vmatprep.subr.mxu0 %v639
        %725 = vmatpush2.msra.mxu0 %v638
        %726 = vmatprep.subr.mxu0 %v637
        %727 = vmatpush2.msra.mxu0 %v636
        %728 = vmatprep.subr.mxu0 %v635
        %729 = vmatpush2.msra.mxu0 %v634
        %730 = vmatprep.subr.mxu0 %v633
        %731 = vmatpush2.msra.mxu0 %v632
        %732 = vmatprep.subr.mxu0 %v631
        %733 = vmatpush2.msra.mxu0 %v630
        %734 = vmatprep.subr.mxu0 %v629
        %735 = vmatpush2.msra.mxu0 %v628
        %736 = vmatprep.mubr.f32.mxu0 %v565
        %737 = vmatmul.mubr.f32.gmra.mxu0 %v564
        %v738 = vpop.f32.mrf.mxu0
        %v739 = vadd.f32 %v665, %v738
        %v740 = vpop.f32.mrf.mxu0
        %v741 = vadd.f32 %v669, %v740
        %742 = vmatprep.mubr.f32.mxu0 %v567
        %743 = vmatmul.mubr.f32.gmra.mxu0 %v566
        %v744 = vpop.f32.mrf.mxu0
        %v745 = vadd.f32 %v665, %v744
        %v746 = vpop.f32.mrf.mxu0
        %v747 = vadd.f32 %v669, %v746
        %748 = vmatprep.mubr.f32.mxu0 %v569
        %749 = vmatmul.mubr.f32.gmra.mxu0 %v568
        %v750 = vpop.f32.mrf.mxu0
        %v751 = vadd.f32 %v665, %v750
        %v752 = vpop.f32.mrf.mxu0
        %v753 = vadd.f32 %v669, %v752
        %754 = vmatprep.mubr.f32.mxu0 %v571
        %755 = vmatmul.mubr.f32.gmra.mxu0 %v570
        %v756 = vpop.f32.mrf.mxu0
        %v757 = vadd.f32 %v665, %v756
        %v758 = vpop.f32.mrf.mxu0
        %v759 = vadd.f32 %v669, %v758
        %760 = vmatprep.mubr.f32.mxu0 %v573
        %761 = vmatmul.mubr.f32.gmra.mxu0 %v572
        %v762 = vpop.f32.mrf.mxu0
        %v763 = vadd.f32 %v665, %v762
        %v764 = vpop.f32.mrf.mxu0
        %v765 = vadd.f32 %v669, %v764
        %766 = vmatprep.mubr.f32.mxu0 %v575
        %767 = vmatmul.mubr.f32.gmra.mxu0 %v574
        %v768 = vpop.f32.mrf.mxu0
        %v769 = vadd.f32 %v665, %v768
        %v770 = vpop.f32.mrf.mxu0
        %v771 = vadd.f32 %v669, %v770
        %772 = vmatprep.mubr.f32.mxu0 %v577
        %773 = vmatmul.mubr.f32.gmra.mxu0 %v576
        %v774 = vpop.f32.mrf.mxu0
        %v775 = vadd.f32 %v665, %v774
        %v776 = vpop.f32.mrf.mxu0
        %v777 = vadd.f32 %v669, %v776
        %778 = vmatprep.mubr.f32.mxu0 %v579
        %779 = vmatmul.mubr.f32.gmra.mxu0 %v578
        %v780 = vpop.f32.mrf.mxu0
        %v781 = vadd.f32 %v665, %v780
        %v782 = vpop.f32.mrf.mxu0
        %v783 = vadd.f32 %v669, %v782
        %784 = vmatprep.mubr.f32.mxu0 %v581
        %785 = vmatmul.mubr.f32.gmra.mxu0 %v580
        %v786 = vpop.f32.mrf.mxu0
        %v787 = vadd.f32 %v665, %v786
        %v788 = vpop.f32.mrf.mxu0
        %v789 = vadd.f32 %v669, %v788
        %790 = vmatprep.mubr.f32.mxu0 %v583
        %791 = vmatmul.mubr.f32.gmra.mxu0 %v582
        %v792 = vpop.f32.mrf.mxu0
        %v793 = vadd.f32 %v665, %v792
        %v794 = vpop.f32.mrf.mxu0
        %v795 = vadd.f32 %v669, %v794
        %796 = vmatprep.mubr.f32.mxu0 %v585
        %797 = vmatmul.mubr.f32.gmra.mxu0 %v584
        %v798 = vpop.f32.mrf.mxu0
        %v799 = vadd.f32 %v665, %v798
        %v800 = vpop.f32.mrf.mxu0
        %v801 = vadd.f32 %v669, %v800
        %802 = vmatprep.mubr.f32.mxu0 %v587
        %803 = vmatmul.mubr.f32.gmra.mxu0 %v586
        %v804 = vpop.f32.mrf.mxu0
        %v805 = vadd.f32 %v665, %v804
        %v806 = vpop.f32.mrf.mxu0
        %v807 = vadd.f32 %v669, %v806
        %808 = vmatprep.mubr.f32.mxu0 %v589
        %809 = vmatmul.mubr.f32.gmra.mxu0 %v588
        %v810 = vpop.f32.mrf.mxu0
        %v811 = vadd.f32 %v665, %v810
        %v812 = vpop.f32.mrf.mxu0
        %v813 = vadd.f32 %v669, %v812
        %814 = vmatprep.mubr.f32.mxu0 %v591
        %815 = vmatmul.mubr.f32.gmra.mxu0 %v590
        %v816 = vpop.f32.mrf.mxu0
        %v817 = vadd.f32 %v665, %v816
        %v818 = vpop.f32.mrf.mxu0
        %v819 = vadd.f32 %v669, %v818
        %820 = vmatprep.mubr.f32.mxu0 %v593
        %821 = vmatmul.mubr.f32.gmra.mxu0 %v592
        %v822 = vpop.f32.mrf.mxu0
        %v823 = vadd.f32 %v665, %v822
        %v824 = vpop.f32.mrf.mxu0
        %v825 = vadd.f32 %v669, %v824
        %826 = vmatprep.mubr.f32.mxu0 %v595
        %827 = vmatmul.mubr.f32.gmra.mxu0 %v594
        %v828 = vpop.f32.mrf.mxu0
        %v829 = vadd.f32 %v665, %v828
        %v830 = vpop.f32.mrf.mxu0
        %v831 = vadd.f32 %v669, %v830
        %832 = vdwg.mxu0
        %v833 = vmax.f32 %v739, 0.0
        %v834 = vmax.f32 %v741, 0.0
        %v835 = vmax.f32 %v745, 0.0
        %v836 = vmax.f32 %v747, 0.0
        %v837 = vmax.f32 %v751, 0.0
        %v838 = vmax.f32 %v753, 0.0
        %v839 = vmax.f32 %v757, 0.0
        %v840 = vmax.f32 %v759, 0.0
        %v841 = vmax.f32 %v763, 0.0
        %v842 = vmax.f32 %v765, 0.0
        %v843 = vmax.f32 %v769, 0.0
        %v844 = vmax.f32 %v771, 0.0
        %v845 = vmax.f32 %v775, 0.0
        %v846 = vmax.f32 %v777, 0.0
        %v847 = vmax.f32 %v781, 0.0
        %v848 = vmax.f32 %v783, 0.0
        %v849 = vmax.f32 %v787, 0.0
        %v850 = vmax.f32 %v789, 0.0
        %v851 = vmax.f32 %v793, 0.0
        %v852 = vmax.f32 %v795, 0.0
        %v853 = vmax.f32 %v799, 0.0
        %v854 = vmax.f32 %v801, 0.0
        %v855 = vmax.f32 %v805, 0.0
        %v856 = vmax.f32 %v807, 0.0
        %v857 = vmax.f32 %v811, 0.0
        %v858 = vmax.f32 %v813, 0.0
        %v859 = vmax.f32 %v817, 0.0
        %v860 = vmax.f32 %v819, 0.0
        %v861 = vmax.f32 %v823, 0.0
        %v862 = vmax.f32 %v825, 0.0
        %v863 = vmax.f32 %v829, 0.0
        %v864 = vmax.f32 %v831, 0.0
        %v865 = vld [vmem:[#allocation8] sm:$0xff]
        %v866 = vld [vmem:[#allocation8 + $0x8] sm:$0xff]
        %v867 = vld [vmem:[#allocation8 + $0x10] sm:$0xff]
        %v868 = vld [vmem:[#allocation8 + $0x18] sm:$0xff]
        %v869 = vld [vmem:[#allocation8 + $0x20] sm:$0xff]
        %v870 = vld [vmem:[#allocation8 + $0x28] sm:$0xff]
        %v871 = vld [vmem:[#allocation8 + $0x30] sm:$0xff]
        %v872 = vld [vmem:[#allocation8 + $0x38] sm:$0xff]
        %v873 = vld [vmem:[#allocation8 + $0x40] sm:$0xff]
        %v874 = vld [vmem:[#allocation8 + $0x48] sm:$0xff]
        %v875 = vld [vmem:[#allocation8 + $0x50] sm:$0xff]
        %v876 = vld [vmem:[#allocation8 + $0x58] sm:$0xff]
        %v877 = vld [vmem:[#allocation8 + $0x60] sm:$0xff]
        %v878 = vld [vmem:[#allocation8 + $0x68] sm:$0xff]
        %v879 = vld [vmem:[#allocation8 + $0x70] sm:$0xff]
        %v880 = vld [vmem:[#allocation8 + $0x78] sm:$0xff]
        %v881 = vld [vmem:[#allocation8 + $0x80] sm:$0xff]
        %v882 = vld [vmem:[#allocation8 + $0x88] sm:$0xff]
        %v883 = vld [vmem:[#allocation8 + $0x90] sm:$0xff]
        %v884 = vld [vmem:[#allocation8 + $0x98] sm:$0xff]
        %v885 = vld [vmem:[#allocation8 + $0xa0] sm:$0xff]
        %v886 = vld [vmem:[#allocation8 + $0xa8] sm:$0xff]
        %v887 = vld [vmem:[#allocation8 + $0xb0] sm:$0xff]
        %v888 = vld [vmem:[#allocation8 + $0xb8] sm:$0xff]
        %v889 = vld [vmem:[#allocation8 + $0xc0] sm:$0xff]
        %v890 = vld [vmem:[#allocation8 + $0xc8] sm:$0xff]
        %v891 = vld [vmem:[#allocation8 + $0xd0] sm:$0xff]
        %v892 = vld [vmem:[#allocation8 + $0xd8] sm:$0xff]
        %v893 = vld [vmem:[#allocation8 + $0xe0] sm:$0xff]
        %v894 = vld [vmem:[#allocation8 + $0xe8] sm:$0xff]
        %v895 = vld [vmem:[#allocation8 + $0xf0] sm:$0xff]
        %v896 = vld [vmem:[#allocation8 + $0xf8] sm:$0xff]
        %v897 = vld [vmem:[%s6] sm:$0x1]
        %v899 = vlaneseq
        %v900 = vshrl.u32 %v899, 7
        %v901 = vsub.s32 0, %v900
        %v902 = vrot.slane %v897, %v901
        %904 = vmatprep.subr.mxu0 0.0
        %905 = vmatpush1.msra.mxu0 %v880
        %906 = vmatprep.subr.mxu0 0.0
        %907 = vmatpush1.msra.mxu0 %v879
        %908 = vmatprep.subr.mxu0 0.0
        %909 = vmatpush1.msra.mxu0 %v878
        %910 = vmatprep.subr.mxu0 0.0
        %911 = vmatpush1.msra.mxu0 %v877
        %912 = vmatprep.subr.mxu0 0.0
        %913 = vmatpush1.msra.mxu0 %v876
        %914 = vmatprep.subr.mxu0 0.0
        %915 = vmatpush1.msra.mxu0 %v875
        %916 = vmatprep.subr.mxu0 0.0
        %917 = vmatpush1.msra.mxu0 %v874
        %918 = vmatprep.subr.mxu0 0.0
        %919 = vmatpush1.msra.mxu0 %v873
        %920 = vmatprep.subr.mxu0 0.0
        %921 = vmatpush1.msra.mxu0 %v872
        %922 = vmatprep.subr.mxu0 0.0
        %923 = vmatpush1.msra.mxu0 %v871
        %924 = vmatprep.subr.mxu0 0.0
        %925 = vmatpush1.msra.mxu0 %v870
        %926 = vmatprep.subr.mxu0 0.0
        %927 = vmatpush1.msra.mxu0 %v869
        %928 = vmatprep.subr.mxu0 0.0
        %929 = vmatpush1.msra.mxu0 %v868
        %930 = vmatprep.subr.mxu0 0.0
        %931 = vmatpush1.msra.mxu0 %v867
        %932 = vmatprep.subr.mxu0 0.0
        %933 = vmatpush1.msra.mxu0 %v866
        %934 = vmatprep.subr.mxu0 0.0
        %935 = vmatpush1.msra.mxu0 %v865
        %936 = vmatprep.subr.mxu0 0.0
        %937 = vmatpush2.msra.mxu0 %v896
        %938 = vmatprep.subr.mxu0 0.0
        %939 = vmatpush2.msra.mxu0 %v895
        %940 = vmatprep.subr.mxu0 0.0
        %941 = vmatpush2.msra.mxu0 %v894
        %942 = vmatprep.subr.mxu0 0.0
        %943 = vmatpush2.msra.mxu0 %v893
        %944 = vmatprep.subr.mxu0 0.0
        %945 = vmatpush2.msra.mxu0 %v892
        %946 = vmatprep.subr.mxu0 0.0
        %947 = vmatpush2.msra.mxu0 %v891
        %948 = vmatprep.subr.mxu0 0.0
        %949 = vmatpush2.msra.mxu0 %v890
        %950 = vmatprep.subr.mxu0 0.0
        %951 = vmatpush2.msra.mxu0 %v889
        %952 = vmatprep.subr.mxu0 0.0
        %953 = vmatpush2.msra.mxu0 %v888
        %954 = vmatprep.subr.mxu0 0.0
        %955 = vmatpush2.msra.mxu0 %v887
        %956 = vmatprep.subr.mxu0 0.0
        %957 = vmatpush2.msra.mxu0 %v886
        %958 = vmatprep.subr.mxu0 0.0
        %959 = vmatpush2.msra.mxu0 %v885
        %960 = vmatprep.subr.mxu0 0.0
        %961 = vmatpush2.msra.mxu0 %v884
        %962 = vmatprep.subr.mxu0 0.0
        %963 = vmatpush2.msra.mxu0 %v883
        %964 = vmatprep.subr.mxu0 0.0
        %965 = vmatpush2.msra.mxu0 %v882
        %966 = vmatprep.subr.mxu0 0.0
        %967 = vmatpush2.msra.mxu0 %v881
        %968 = vmatprep.mubr.f32.mxu0 %v834
        %969 = vmatmul.mubr.f32.gmra.mxu0 %v833
        %v970 = vpop.f32.mrf.mxu0
        %v971 = vadd.f32 %v902, %v970
        %v972 = vpop.f32.mrf.mxu0
        %973 = vmatprep.mubr.f32.mxu0 %v836
        %974 = vmatmul.mubr.f32.gmra.mxu0 %v835
        %v975 = vpop.f32.mrf.mxu0
        %v976 = vadd.f32 %v902, %v975
        %v977 = vpop.f32.mrf.mxu0
        %978 = vmatprep.mubr.f32.mxu0 %v838
        %979 = vmatmul.mubr.f32.gmra.mxu0 %v837
        %v980 = vpop.f32.mrf.mxu0
        %v981 = vadd.f32 %v902, %v980
        %v982 = vpop.f32.mrf.mxu0
        %983 = vmatprep.mubr.f32.mxu0 %v840
        %984 = vmatmul.mubr.f32.gmra.mxu0 %v839
        %v985 = vpop.f32.mrf.mxu0
        %v986 = vadd.f32 %v902, %v985
        %v987 = vpop.f32.mrf.mxu0
        %988 = vmatprep.mubr.f32.mxu0 %v842
        %989 = vmatmul.mubr.f32.gmra.mxu0 %v841
        %v990 = vpop.f32.mrf.mxu0
        %v991 = vadd.f32 %v902, %v990
        %v992 = vpop.f32.mrf.mxu0
        %993 = vmatprep.mubr.f32.mxu0 %v844
        %994 = vmatmul.mubr.f32.gmra.mxu0 %v843
        %v995 = vpop.f32.mrf.mxu0
        %v996 = vadd.f32 %v902, %v995
        %v997 = vpop.f32.mrf.mxu0
        %998 = vmatprep.mubr.f32.mxu0 %v846
        %999 = vmatmul.mubr.f32.gmra.mxu0 %v845
        %v1000 = vpop.f32.mrf.mxu0
        %v1001 = vadd.f32 %v902, %v1000
        %v1002 = vpop.f32.mrf.mxu0
        %1003 = vmatprep.mubr.f32.mxu0 %v848
        %1004 = vmatmul.mubr.f32.gmra.mxu0 %v847
        %v1005 = vpop.f32.mrf.mxu0
        %v1006 = vadd.f32 %v902, %v1005
        %v1007 = vpop.f32.mrf.mxu0
        %1008 = vmatprep.mubr.f32.mxu0 %v850
        %1009 = vmatmul.mubr.f32.gmra.mxu0 %v849
        %v1010 = vpop.f32.mrf.mxu0
        %v1011 = vadd.f32 %v902, %v1010
        %v1012 = vpop.f32.mrf.mxu0
        %1013 = vmatprep.mubr.f32.mxu0 %v852
        %1014 = vmatmul.mubr.f32.gmra.mxu0 %v851
        %v1015 = vpop.f32.mrf.mxu0
        %v1016 = vadd.f32 %v902, %v1015
        %v1017 = vpop.f32.mrf.mxu0
        %1018 = vmatprep.mubr.f32.mxu0 %v854
        %1019 = vmatmul.mubr.f32.gmra.mxu0 %v853
        %v1020 = vpop.f32.mrf.mxu0
        %v1021 = vadd.f32 %v902, %v1020
        %v1022 = vpop.f32.mrf.mxu0
        %1023 = vmatprep.mubr.f32.mxu0 %v856
        %1024 = vmatmul.mubr.f32.gmra.mxu0 %v855
        %v1025 = vpop.f32.mrf.mxu0
        %v1026 = vadd.f32 %v902, %v1025
        %v1027 = vpop.f32.mrf.mxu0
        %1028 = vmatprep.mubr.f32.mxu0 %v858
        %1029 = vmatmul.mubr.f32.gmra.mxu0 %v857
        %v1030 = vpop.f32.mrf.mxu0
        %v1031 = vadd.f32 %v902, %v1030
        %v1032 = vpop.f32.mrf.mxu0
        %1033 = vmatprep.mubr.f32.mxu0 %v860
        %1034 = vmatmul.mubr.f32.gmra.mxu0 %v859
        %v1035 = vpop.f32.mrf.mxu0
        %v1036 = vadd.f32 %v902, %v1035
        %v1037 = vpop.f32.mrf.mxu0
        %1038 = vmatprep.mubr.f32.mxu0 %v862
        %1039 = vmatmul.mubr.f32.gmra.mxu0 %v861
        %v1040 = vpop.f32.mrf.mxu0
        %v1041 = vadd.f32 %v902, %v1040
        %v1042 = vpop.f32.mrf.mxu0
        %1043 = vmatprep.mubr.f32.mxu0 %v864
        %1044 = vmatmul.mubr.f32.gmra.mxu0 %v863
        %v1045 = vpop.f32.mrf.mxu0
        %v1046 = vadd.f32 %v902, %v1045
        %v1047 = vpop.f32.mrf.mxu0
        %1048 = vdwg.mxu0
        %vm1049 = vcmp.gt.f32.partialorder %v343, 0.5
        %vm1050 = vcmp.gt.f32.partialorder %v344, 0.5
        %vm1051 = vcmp.gt.f32.partialorder %v345, 0.5
        %vm1052 = vcmp.gt.f32.partialorder %v346, 0.5
        %vm1053 = vcmp.gt.f32.partialorder %v347, 0.5
        %vm1054 = vcmp.gt.f32.partialorder %v348, 0.5
        %vm1055 = vcmp.gt.f32.partialorder %v349, 0.5
        %vm1056 = vcmp.gt.f32.partialorder %v350, 0.5
        %vm1057 = vcmp.gt.f32.partialorder %v351, 0.5
        %vm1058 = vcmp.gt.f32.partialorder %v352, 0.5
        %vm1059 = vcmp.gt.f32.partialorder %v353, 0.5
        %vm1060 = vcmp.gt.f32.partialorder %v354, 0.5
        %vm1061 = vcmp.gt.f32.partialorder %v355, 0.5
        %vm1062 = vcmp.gt.f32.partialorder %v356, 0.5
        %vm1063 = vcmp.gt.f32.partialorder %v357, 0.5
        %vm1064 = vcmp.gt.f32.partialorder %v358, 0.5
        %v1065 = vsel %vm1049, -10000000.0, %v971
        %v1066 = vsel %vm1050, -10000000.0, %v976
        %v1067 = vsel %vm1051, -10000000.0, %v981
        %v1068 = vsel %vm1052, -10000000.0, %v986
        %v1069 = vsel %vm1053, -10000000.0, %v991
        %v1070 = vsel %vm1054, -10000000.0, %v996
        %v1071 = vsel %vm1055, -10000000.0, %v1001
        %v1072 = vsel %vm1056, -10000000.0, %v1006
        %v1073 = vsel %vm1057, -10000000.0, %v1011
        %v1074 = vsel %vm1058, -10000000.0, %v1016
        %v1075 = vsel %vm1059, -10000000.0, %v1021
        %v1076 = vsel %vm1060, -10000000.0, %v1026
        %v1077 = vsel %vm1061, -10000000.0, %v1031
        %v1078 = vsel %vm1062, -10000000.0, %v1036
        %v1079 = vsel %vm1063, -10000000.0, %v1041
        %v1080 = vsel %vm1064, -10000000.0, %v1046
        %1081 = vmax.xlane.f32.xlu0 %v1065
        %v1082 = vpop.xlane.xlu0 %1081
        %1083 = vmax.xlane.f32.xlu0 %v1066
        %v1084 = vpop.xlane.xlu0 %1083
        %1085 = vmax.xlane.f32.xlu0 %v1067
        %v1086 = vpop.xlane.xlu0 %1085
        %1087 = vmax.xlane.f32.xlu0 %v1068
        %v1088 = vpop.xlane.xlu0 %1087
        %1089 = vmax.xlane.f32.xlu0 %v1069
        %v1090 = vpop.xlane.xlu0 %1089
        %1091 = vmax.xlane.f32.xlu0 %v1070
        %v1092 = vpop.xlane.xlu0 %1091
        %1093 = vmax.xlane.f32.xlu0 %v1071
        %v1094 = vpop.xlane.xlu0 %1093
        %1095 = vmax.xlane.f32.xlu0 %v1072
        %v1096 = vpop.xlane.xlu0 %1095
        %1097 = vmax.xlane.f32.xlu0 %v1073
        %v1098 = vpop.xlane.xlu0 %1097
        %1099 = vmax.xlane.f32.xlu0 %v1074
        %v1100 = vpop.xlane.xlu0 %1099
        %1101 = vmax.xlane.f32.xlu0 %v1075
        %v1102 = vpop.xlane.xlu0 %1101
        %1103 = vmax.xlane.f32.xlu0 %v1076
        %v1104 = vpop.xlane.xlu0 %1103
        %1105 = vmax.xlane.f32.xlu0 %v1077
        %v1106 = vpop.xlane.xlu0 %1105
        %1107 = vmax.xlane.f32.xlu0 %v1078
        %v1108 = vpop.xlane.xlu0 %1107
        %1109 = vmax.xlane.f32.xlu0 %v1079
        %v1110 = vpop.xlane.xlu0 %1109
        %1111 = vmax.xlane.f32.xlu0 %v1080
        %v1112 = vpop.xlane.xlu0 %1111
        %v1113 = vsub.f32 %v1065, %v1082
        %v1114 = vsub.f32 %v1066, %v1084
        %v1115 = vsub.f32 %v1067, %v1086
        %v1116 = vsub.f32 %v1068, %v1088
        %v1117 = vsub.f32 %v1069, %v1090
        %v1118 = vsub.f32 %v1070, %v1092
        %v1119 = vsub.f32 %v1071, %v1094
        %v1120 = vsub.f32 %v1072, %v1096
        %v1121 = vsub.f32 %v1073, %v1098
        %v1122 = vsub.f32 %v1074, %v1100
        %v1123 = vsub.f32 %v1075, %v1102
        %v1124 = vsub.f32 %v1076, %v1104
        %v1125 = vsub.f32 %v1077, %v1106
        %v1126 = vsub.f32 %v1078, %v1108
        %v1127 = vsub.f32 %v1079, %v1110
        %v1128 = vsub.f32 %v1080, %v1112
        %v1129 = vmul.f32 %v1113, 1.442695
        %v1130 = vpow.pop %v1129
        %v1131 = vmul.f32 %v1114, 1.442695
        %v1132 = vpow.pop %v1131
        %v1133 = vmul.f32 %v1115, 1.442695
        %v1134 = vpow.pop %v1133
        %v1135 = vmul.f32 %v1116, 1.442695
        %v1136 = vpow.pop %v1135
        %v1137 = vmul.f32 %v1117, 1.442695
        %v1138 = vpow.pop %v1137
        %v1139 = vmul.f32 %v1118, 1.442695
        %v1140 = vpow.pop %v1139
        %v1141 = vmul.f32 %v1119, 1.442695
        %v1142 = vpow.pop %v1141
        %v1143 = vmul.f32 %v1120, 1.442695
        %v1144 = vpow.pop %v1143
        %v1145 = vmul.f32 %v1121, 1.442695
        %v1146 = vpow.pop %v1145
        %v1147 = vmul.f32 %v1122, 1.442695
        %v1148 = vpow.pop %v1147
        %v1149 = vmul.f32 %v1123, 1.442695
        %v1150 = vpow.pop %v1149
        %v1151 = vmul.f32 %v1124, 1.442695
        %v1152 = vpow.pop %v1151
        %v1153 = vmul.f32 %v1125, 1.442695
        %v1154 = vpow.pop %v1153
        %v1155 = vmul.f32 %v1126, 1.442695
        %v1156 = vpow.pop %v1155
        %v1157 = vmul.f32 %v1127, 1.442695
        %v1158 = vpow.pop %v1157
        %v1159 = vmul.f32 %v1128, 1.442695
        %v1160 = vpow.pop %v1159
        %1161 = vadd.xlane.f32.xlu0 %v1130
        %v1162 = vpop.xlane.xlu0 %1161
        %1163 = vadd.xlane.f32.xlu0 %v1132
        %v1164 = vpop.xlane.xlu0 %1163
        %1165 = vadd.xlane.f32.xlu0 %v1134
        %v1166 = vpop.xlane.xlu0 %1165
        %1167 = vadd.xlane.f32.xlu0 %v1136
        %v1168 = vpop.xlane.xlu0 %1167
        %1169 = vadd.xlane.f32.xlu0 %v1138
        %v1170 = vpop.xlane.xlu0 %1169
        %1171 = vadd.xlane.f32.xlu0 %v1140
        %v1172 = vpop.xlane.xlu0 %1171
        %1173 = vadd.xlane.f32.xlu0 %v1142
        %v1174 = vpop.xlane.xlu0 %1173
        %1175 = vadd.xlane.f32.xlu0 %v1144
        %v1176 = vpop.xlane.xlu0 %1175
        %1177 = vadd.xlane.f32.xlu0 %v1146
        %v1178 = vpop.xlane.xlu0 %1177
        %1179 = vadd.xlane.f32.xlu0 %v1148
        %v1180 = vpop.xlane.xlu0 %1179
        %1181 = vadd.xlane.f32.xlu0 %v1150
        %v1182 = vpop.xlane.xlu0 %1181
        %1183 = vadd.xlane.f32.xlu0 %v1152
        %v1184 = vpop.xlane.xlu0 %1183
        %1185 = vadd.xlane.f32.xlu0 %v1154
        %v1186 = vpop.xlane.xlu0 %1185
        %1187 = vadd.xlane.f32.xlu0 %v1156
        %v1188 = vpop.xlane.xlu0 %1187
        %1189 = vadd.xlane.f32.xlu0 %v1158
        %v1190 = vpop.xlane.xlu0 %1189
        %1191 = vadd.xlane.f32.xlu0 %v1160
        %v1192 = vpop.xlane.xlu0 %1191
        %v1193 = vrcp.pop %v1162
        %v1194 = vrcp.pop %v1164
        %v1195 = vrcp.pop %v1166
        %v1196 = vrcp.pop %v1168
        %v1197 = vrcp.pop %v1170
        %v1198 = vrcp.pop %v1172
        %v1199 = vrcp.pop %v1174
        %v1200 = vrcp.pop %v1176
        %v1201 = vrcp.pop %v1178
        %v1202 = vrcp.pop %v1180
        %v1203 = vrcp.pop %v1182
        %v1204 = vrcp.pop %v1184
        %v1205 = vrcp.pop %v1186
        %v1206 = vrcp.pop %v1188
        %v1207 = vrcp.pop %v1190
        %v1208 = vrcp.pop %v1192
        %v1209 = vmul.f32 %v1162, %v1193
        %v1210 = vmul.f32 %v1164, %v1194
        %v1211 = vmul.f32 %v1166, %v1195
        %v1212 = vmul.f32 %v1168, %v1196
        %v1213 = vmul.f32 %v1170, %v1197
        %v1214 = vmul.f32 %v1172, %v1198
        %v1215 = vmul.f32 %v1174, %v1199
        %v1216 = vmul.f32 %v1176, %v1200
        %v1217 = vmul.f32 %v1178, %v1201
        %v1218 = vmul.f32 %v1180, %v1202
        %v1219 = vmul.f32 %v1182, %v1203
        %v1220 = vmul.f32 %v1184, %v1204
        %v1221 = vmul.f32 %v1186, %v1205
        %v1222 = vmul.f32 %v1188, %v1206
        %v1223 = vmul.f32 %v1190, %v1207
        %v1224 = vmul.f32 %v1192, %v1208
        %v1225 = vsub.f32 2.0, %v1209
        %v1226 = vsub.f32 2.0, %v1210
        %v1227 = vsub.f32 2.0, %v1211
        %v1228 = vsub.f32 2.0, %v1212
        %v1229 = vsub.f32 2.0, %v1213
        %v1230 = vsub.f32 2.0, %v1214
        %v1231 = vsub.f32 2.0, %v1215
        %v1232 = vsub.f32 2.0, %v1216
        %v1233 = vsub.f32 2.0, %v1217
        %v1234 = vsub.f32 2.0, %v1218
        %v1235 = vsub.f32 2.0, %v1219
        %v1236 = vsub.f32 2.0, %v1220
        %v1237 = vsub.f32 2.0, %v1221
        %v1238 = vsub.f32 2.0, %v1222
        %v1239 = vsub.f32 2.0, %v1223
        %v1240 = vsub.f32 2.0, %v1224
        %v1241 = vmul.f32 %v1193, %v1225
        %v1242 = vmul.f32 %v1194, %v1226
        %v1243 = vmul.f32 %v1195, %v1227
        %v1244 = vmul.f32 %v1196, %v1228
        %v1245 = vmul.f32 %v1197, %v1229
        %v1246 = vmul.f32 %v1198, %v1230
        %v1247 = vmul.f32 %v1199, %v1231
        %v1248 = vmul.f32 %v1200, %v1232
        %v1249 = vmul.f32 %v1201, %v1233
        %v1250 = vmul.f32 %v1202, %v1234
        %v1251 = vmul.f32 %v1203, %v1235
        %v1252 = vmul.f32 %v1204, %v1236
        %v1253 = vmul.f32 %v1205, %v1237
        %v1254 = vmul.f32 %v1206, %v1238
        %v1255 = vmul.f32 %v1207, %v1239
        %v1256 = vmul.f32 %v1208, %v1240
        %v1257 = vmul.f32 %v1130, %v1241
        %v1258 = vmul.f32 %v1132, %v1242
        %v1259 = vmul.f32 %v1134, %v1243
        %v1260 = vmul.f32 %v1136, %v1244
        %v1261 = vmul.f32 %v1138, %v1245
        %v1262 = vmul.f32 %v1140, %v1246
        %v1263 = vmul.f32 %v1142, %v1247
        %v1264 = vmul.f32 %v1144, %v1248
        %v1265 = vmul.f32 %v1146, %v1249
        %v1266 = vmul.f32 %v1148, %v1250
        %v1267 = vmul.f32 %v1150, %v1251
        %v1268 = vmul.f32 %v1152, %v1252
        %v1269 = vmul.f32 %v1154, %v1253
        %v1270 = vmul.f32 %v1156, %v1254
        %v1271 = vmul.f32 %v1158, %v1255
        %v1272 = vmul.f32 %v1160, %v1256
        %1273 = vst [vmem:[%s340] sm:$0xff] %v1257
        %1274 = vst [vmem:[%s340 + $0x8] sm:$0xff] %v1258
        %1275 = vst [vmem:[%s340 + $0x10] sm:$0xff] %v1259
        %1276 = vst [vmem:[%s340 + $0x18] sm:$0xff] %v1260
        %1277 = vst [vmem:[%s340 + $0x20] sm:$0xff] %v1261
        %1278 = vst [vmem:[%s340 + $0x28] sm:$0xff] %v1262
        %1279 = vst [vmem:[%s340 + $0x30] sm:$0xff] %v1263
        %1280 = vst [vmem:[%s340 + $0x38] sm:$0xff] %v1264
        %1281 = vst [vmem:[%s340 + $0x40] sm:$0xff] %v1265
        %1282 = vst [vmem:[%s340 + $0x48] sm:$0xff] %v1266
        %1283 = vst [vmem:[%s340 + $0x50] sm:$0xff] %v1267
        %1284 = vst [vmem:[%s340 + $0x58] sm:$0xff] %v1268
        %1285 = vst [vmem:[%s340 + $0x60] sm:$0xff] %v1269
        %1286 = vst [vmem:[%s340 + $0x68] sm:$0xff] %v1270
        %1287 = vst [vmem:[%s340 + $0x70] sm:$0xff] %v1271
        %1288 = vst [vmem:[%s340 + $0x78] sm:$0xff] %v1272
        %s1289 = sand.u32 %s186, 1
        %s1290 = scalar_lea.sflag [#allocation4], %s1289
        %s1291 = sand.u32 %s186, 1
        %s1292 = smul.addr %s1291, 128
        %s1293 = scalar_lea.vmem [#allocation10], %s1292
        // Predicated region
        $region65: #{tpu_custom_call.1} parent=47 // pred_check
          %p1294 = pneg %p196
        $region66: #{tpu_custom_call.1} parent=47 // pred_check_branch
          %1296 = sbr.rel (%p1294) target = $region68
        $region67: #{tpu_custom_call.1} parent=47 // pred_region
          %s1297 = smul.u32 16, %s26
          %s1299 = ssub.s32 2048, 2048
          %1300 = vsyncadd %s1290, %s1299
          %s1301 = smul.addr %s1297, 128
          %s1302 = scalar_lea.hbm %s7, %s1301
          %s1303 = sshll.u32 %s1293, 4
          %s1304 = int_to_ptr.vmem [resolvable:$true] %s1303
          %1309 = dma.vmem_to_hbm [thread:$0]  %s1304, 2048, %s1302, %s1290, 128, 128, 8
        $region68: #{tpu_custom_call.1} parent=47 // pred_fallthru
          _
      $region48: #{tpu_custom_call.1} parent=5 // pred_fallthru
        _
      %p1310 = scmp.le.s32.totalorder 2, %s21
      // Predicated region
      $region69: #{tpu_custom_call.1} parent=5 // pred_check
        %p1311 = pneg %p1310
      $region70: #{tpu_custom_call.1} parent=5 // pred_check_branch
        %1313 = sbr.rel (%p1311) target = $region72
      $region71: #{tpu_custom_call.1} parent=5 // pred_region
        %s1314 = ssub.s32 %s21, 2
        // Predicated region
        $region73: #{tpu_custom_call.1} parent=71 // pred_check
          %p1315 = pneg %p202
        $region74: #{tpu_custom_call.1} parent=71 // pred_check_branch
          %1317 = sbr.rel (%p1315) target = $region76
        $region75: #{tpu_custom_call.1} parent=71 // pred_region
          %s1318 = sand.u32 %s187, 1
          %s1319 = scalar_lea.sflag [#allocation4], %s1318
          %s1320 = sand.u32 %s187, 1
          %s1321 = smul.addr %s1320, 128
          %s1322 = scalar_lea.vmem [#allocation10], %s1321
          %1323 = dma.done %s1319, 2048
        $region76: #{tpu_custom_call.1} parent=71 // pred_fallthru
          _
      $region72: #{tpu_custom_call.1} parent=5 // pred_fallthru
        _
    $region6: #{tpu_custom_call.1} parent=1 // loop_footer
      %s25 = sadd.s32 1, %s21
    $region7: #{tpu_custom_call.1} parent=1 // loop_footer_branch
      %20 = sbr.rel target = $region3
    $region8: #{tpu_custom_call.1} parent=1 // loop_exit
      _
    %1324 = vsyncpa [#allocation3], 1
    %s1325 = scalar_lea.sflag [#allocation3], 1
    %1326 = vsyncpa %s1325, 1
    %1327 = vsyncpa [#allocation6], 1
    %1328 = vsyncpa [#allocation9], 1
    %1329 = vsyncpa [#allocation4], 1
    %s1330 = scalar_lea.sflag [#allocation4], 1
    %1331 = vsyncpa %s1330, 1

</llo_original>
